<compile_context>
chip_gen: v7x
topology: tpu7x:2x2x1
jax: 0.10.0
libtpu: 0.0.40
codegen_flags: <defaults>
</compile_context>

<pallas_src>
import functools

import jax
import jax.numpy as jnp
from jax import lax
from jax.experimental import pallas as pl
from jax.experimental.pallas import tpu as pltpu

LANES = 128


def _round_up(x, m):
    return ((x + m - 1) // m) * m


# ----------------------------------------------------------------------------
# Parameter construction (mirrors C_REN.__init__ + set_model_param) + perf folds
# ----------------------------------------------------------------------------
def make_cren_params(key, n_inputs, n_outputs, n_states, n_nl, std=0.1, epsilon=1e-3):
    assert n_nl >= 1  # TODO(synk): n_nl == 0 branch of torch forward not supported in-kernel.
    assert n_nl + n_states + n_outputs <= LANES, "result layout must fit in 128 lanes"

    ks = jax.random.split(key, 10)
    dim = 2 * n_states + n_nl
    X = jax.random.normal(ks[0], (dim, dim), jnp.float32) * std
    Y1 = jax.random.normal(ks[1], (n_states, n_states), jnp.float32) * std
    B2 = jax.random.normal(ks[2], (n_states, n_inputs), jnp.float32) * std
    C2 = jax.random.normal(ks[3], (n_outputs, n_states), jnp.float32) * std
    D21 = jax.random.normal(ks[4], (n_outputs, n_nl), jnp.float32) * std
    D22 = jax.random.normal(ks[5], (n_outputs, n_inputs), jnp.float32) * std
    D12 = jax.random.normal(ks[6], (n_nl, n_inputs), jnp.float32) * std
    # bias params exist in the torch module but are NOT used in forward(); kept for parity.
    bx = jax.random.normal(ks[7], (n_states,), jnp.float32)
    bv = jax.random.normal(ks[8], (n_nl,), jnp.float32)
    bu = jax.random.normal(ks[9], (n_outputs,), jnp.float32)

    # ---- set_model_param() ----
    H = X.T @ X + epsilon * jnp.eye(dim, dtype=jnp.float32)
    h1 = H[:n_states]
    h2 = H[n_states:n_states + n_nl]
    h3 = H[n_states + n_nl:]
    H11 = h1[:, :n_states]
    H21 = h2[:, :n_states]
    H22 = h2[:, n_states:n_states + n_nl]
    H31 = h3[:, :n_states]
    H32 = h3[:, n_states:n_states + n_nl]
    H33 = h3[:, n_states + n_nl:]
    P = H33
    Fm = H31
    B1 = H32
    E = 0.5 * (H11 + P + Y1 - Y1.T)
    Lam = 0.5 * jnp.diag(H22)
    D11 = -jnp.tril(H22, k=-1)
    C1 = -H21

    # ---- Fold 1: E^{-1} into the state-update weights (one-time solve, not inv). ----
    EiFB = jnp.linalg.solve(E, jnp.concatenate([Fm, B1, B2], axis=1))
    Fs = EiFB[:, :n_states]
    B1s = EiFB[:, n_states:n_states + n_nl]
    B2s = EiFB[:, n_states + n_nl:]

    # ---- Fold 2: 1/Lambda into the equilibrium rows. ----
    inv_lam = (1.0 / Lam)[:, None]
    C1s = C1 * inv_lam
    D11s = D11 * inv_lam
    D12s = D12 * inv_lam

    # ---- One packed weight slab (host-side, one-time). Column layout of every result row:
    #        [ b (n_nl) | state_plus (n_states) | output (n_outputs) | zero pad to 128 ]
    ni_pad = _round_up(n_inputs, 8)
    nl_pad = _round_up(n_nl, 8)
    c_b, c_s, c_o = 0, n_nl, n_nl + n_states

    # Input-side weights: inpt @ W_in contributes to b, state_plus and output columns.
    W_in = jnp.zeros((ni_pad, LANES), jnp.float32)
    W_in = W_in.at[:n_inputs, c_b:c_b + n_nl].set(D12s.T)
    W_in = W_in.at[:n_inputs, c_s:c_s + n_states].set(B2s.T)
    W_in = W_in.at[:n_inputs, c_o:c_o + n_outputs].set(D22.T)

    # State-side weights take the FULL carried (., 128) slab as input: only the rows that
    # correspond to the state lanes are non-zero, so no lane-slicing is needed in-kernel.
    W_state = jnp.zeros((LANES, LANES), jnp.float32)
    W_state = W_state.at[c_s:c_s + n_states, c_b:c_b + n_nl].set(C1s.T)
    W_state = W_state.at[c_s:c_s + n_states, c_s:c_s + n_states].set(Fs.T)
    W_state = W_state.at[c_s:c_s + n_states, c_o:c_o + n_outputs].set(C2.T)

    # w-side weights take the full (., 128) w slab (only lanes < n_nl are non-zero).
    W_w = jnp.zeros((LANES, LANES), jnp.float32)
    W_w = W_w.at[:n_nl, c_s:c_s + n_states].set(B1s.T)
    W_w = W_w.at[:n_nl, c_o:c_o + n_outputs].set(D21.T)

    # Strictly-lower D11 rows, pre-scaled by 1/Lambda, zero padded to (nl_pad, 128).
    D11pad = jnp.zeros((nl_pad, LANES), jnp.float32)
    D11pad = D11pad.at[:n_nl, :n_nl].set(D11s)

    w_slab = jnp.concatenate([W_in, W_state, W_w, D11pad], axis=0)  # (ni_pad+256+nl_pad, 128)

    return dict(
        # raw params (mirror the torch module; used only by the reference)
        F=Fm, B1=B1, B2=B2, E=E, Lambda=Lam, C1=C1, D11=D11, D12=D12,
        C2=C2, D21=D21, D22=D22, bx=bx, bv=bv, bu=bu,
        # folded & packed kernel params
        w_slab=w_slab,
        dims=dict(n_inputs=n_inputs, n_outputs=n_outputs, n_states=n_states, n_nl=n_nl),
    )


# ----------------------------------------------------------------------------
# Pallas kernel (time rollout with resident weights + carried state scratch)
# ----------------------------------------------------------------------------
def _make_cren_kernel(n_inputs, n_states, n_outputs, n_nl, tm, bt, ni_pad, nl_pad):
    r_in = 0
    r_state = r_in + ni_pad
    r_w = r_state + LANES
    r_d11 = r_w + LANES

    def kernel(x_ref, s0_ref, wslab_ref, out_ref, carry_ref):
        # (Re)initialize the carried state slab at the start of each batch tile's rollout.
        @pl.when(pl.program_id(1) == 0)
        def _init():
            carry_ref[...] = s0_ref[...]

        # Static, 8-row-aligned views of the packed weight slab (resident in VMEM).
        w_in = wslab_ref[r_in:r_in + ni_pad, :][:n_inputs, :]        # (n_inputs, 128)
        w_state = wslab_ref[r_state:r_state + LANES, :]              # (128, 128)
        w_w = wslab_ref[r_w:r_w + LANES, :]                          # (128, 128)
        d11s = wslab_ref[r_d11:r_d11 + nl_pad, :]                    # (nl_pad, 128)

        lane = lax.broadcasted_iota(jnp.int32, (1, LANES), 1)

        carry = carry_ref[...]                                       # (bt, 128)
        for t in range(tm):                                          # time chunk, unrolled
            # Input- and state-side contributions for every lane of the result layout.
            r_pre = (jnp.dot(x_ref[t], w_in, preferred_element_type=jnp.float32)
                     + jnp.dot(carry, w_state, preferred_element_type=jnp.float32))

            # Serial equilibrium solve (forward substitution through strictly-lower D11,
            # rows pre-scaled by 1/Lambda). Per step: VPU mul + masked add, one XLU
            # lane-reduce, one EUP tanh, one VPU select. Lanes >= n_nl stay zero.
            w = jnp.zeros((bt, LANES), jnp.float32)
            for i in range(n_nl):
                mask = lane == i
                v_i = jnp.sum(d11s[i:i + 1, :] * w + jnp.where(mask, r_pre, 0.0),
                              axis=-1, keepdims=True)                # (bt, 1)
                w = jnp.where(mask, jnp.tanh(v_i), w)

            # w-side contribution (B1s / D21); b lanes untouched (zero weight columns).
            r_out = r_pre + jnp.dot(w, w_w, preferred_element_type=jnp.float32)

            out_ref[t] = r_out                                        # lane-dense (bt, 128)
            carry = r_out

        carry_ref[...] = carry

    return kernel


@functools.partial(jax.jit,
                   static_argnames=("n_inputs", "n_outputs", "n_states", "n_nl", "tm", "bt"))
def _cren_rollout_impl(x_seq, state0, w_slab, *, n_inputs, n_outputs, n_states, n_nl, tm, bt):
    T, B, _ = x_seq.shape
    ni_pad = _round_up(n_inputs, 8)
    nl_pad = _round_up(n_nl, 8)
    rows = w_slab.shape[0]

    # Initial carried slab: zeros with the state placed in its lane slot (built host-side,
    # so the kernel never does lane shifts).
    slab0 = jnp.zeros((B, LANES), jnp.float32)
    slab0 = slab0.at[:, n_nl:n_nl + n_states].set(state0.astype(jnp.float32))

    kernel = _make_cren_kernel(n_inputs, n_states, n_outputs, n_nl, tm, bt, ni_pad, nl_pad)

    out = pl.pallas_call(
        kernel,
        out_shape=jax.ShapeDtypeStruct((T, B, LANES), jnp.float32),
        grid_spec=pltpu.PrefetchScalarGridSpec(
            num_scalar_prefetch=0,
            grid=(B // bt, T // tm),
            in_specs=[
                pl.BlockSpec((tm, bt, n_inputs), lambda b, t: (t, b, 0)),
                pl.BlockSpec((bt, LANES), lambda b, t: (b, 0)),
                pl.BlockSpec((rows, LANES), lambda b, t: (0, 0)),   # resident weights
            ],
            out_specs=pl.BlockSpec((tm, bt, LANES), lambda b, t: (t, b, 0)),
            scratch_shapes=[pltpu.VMEM((bt, LANES), jnp.float32)],  # carried state slab
        ),
        compiler_params=pltpu.CompilerParams(
            dimension_semantics=("parallel", "arbitrary")),
    )(x_seq.astype(jnp.float32), slab0, w_slab)

    outputs = out[:, :, n_nl + n_states:n_nl + n_states + n_outputs]   # (T, B, n_outputs)
    states = out[:, :, n_nl:n_nl + n_states]                           # (T, B, n_states)
    return outputs, states


# ----------------------------------------------------------------------------
# Public wrappers
# ----------------------------------------------------------------------------
def cren_rollout_pallas(x_seq, state0, params, *, tm=None, bt=None):
    """Batched sequence rollout. x_seq: (T, B, n_inputs), state0: (B, n_states)."""
    T, B, _ = x_seq.shape
    d = params["dims"]
    if tm is None:
        tm = min(T, 8)
    if bt is None:
        bt = min(B, 8)
    assert T % tm == 0 and B % bt == 0
    return _cren_rollout_impl(x_seq, state0, params["w_slab"],
                              n_inputs=d["n_inputs"], n_outputs=d["n_outputs"],
                              n_states=d["n_states"], n_nl=d["n_nl"], tm=tm, bt=bt)


def cren_forward_pallas(inpt, state, params):
    """Single-step forward: exact torch C_REN.forward(inpt, state) semantics."""
    d = params["dims"]
    outs, states = _cren_rollout_impl(
        inpt.reshape(1, 1, -1), state.reshape(1, -1), params["w_slab"],
        n_inputs=d["n_inputs"], n_outputs=d["n_outputs"],
        n_states=d["n_states"], n_nl=d["n_nl"], tm=1, bt=1)
    return outs[0, 0], states[0, 0]


# ----------------------------------------------------------------------------
# Plain-JAX references (mirror the torch forward semantics exactly, raw params)
# ----------------------------------------------------------------------------
def cren_forward_ref(inpt, state, params):
    C1, D11, D12 = params["C1"], params["D11"], params["D12"]
    Lam = params["Lambda"]
    Fm, B1, B2, E = params["F"], params["B1"], params["B2"], params["E"]
    C2, D21, D22 = params["C2"], params["D21"], params["D22"]
    n_nl = Lam.shape[0]
    w = jnp.zeros((n_nl,), jnp.float32)
    for i in range(n_nl):
        v = C1[i] @ state + D11[i] @ w + D12[i] @ inpt
        w = w.at[i].set(jnp.tanh(v / Lam[i]))
    ex = Fm @ state + B1 @ w + B2 @ inpt
    state_plus = jnp.linalg.solve(E, ex)
    out = C2 @ state + D21 @ w + D22 @ inpt
    return out, state_plus


def cren_rollout_ref(x_seq, state0, params):
    step = jax.vmap(lambda i, s: cren_forward_ref(i, s, params))
    outs, state = [], state0
    for t in range(x_seq.shape[0]):
        out, state = step(x_seq[t], state)
        outs.append(out)
    return jnp.stack(outs, axis=0), state


# ----------------------------------------------------------------------------
if __name__ == "__main__":
    n_inputs, n_outputs, n_states, n_nl = 4, 3, 8, 8
    T, B = 16, 8

    key = jax.random.PRNGKey(0)
    kp, ki, ks, kq, kr = jax.random.split(key, 5)
    params = make_cren_params(kp, n_inputs, n_outputs, n_states, n_nl)

    # --- single step (exact torch forward parity) ---
    inpt = jax.random.normal(ki, (n_inputs,), jnp.float32)
    state = jax.random.normal(ks, (n_states,), jnp.float32)
    out, state_plus = cren_forward_pallas(inpt, state, params)
    jax.block_until_ready((out, state_plus))
    out_ref, sp_ref = cren_forward_ref(inpt, state, params)
    assert out.shape == (n_outputs,) and state_plus.shape == (n_states,)
    assert jnp.allclose(out, out_ref, atol=1e-4, rtol=1e-4), (out, out_ref)
    assert jnp.allclose(state_plus, sp_ref, atol=1e-4, rtol=1e-4), (state_plus, sp_ref)

    # --- batched sequence rollout (optimized path: one pallas_call, resident weights) ---
    x_seq = jax.random.normal(kq, (T, B, n_inputs), jnp.float32)
    state0 = jax.random.normal(kr, (B, n_states), jnp.float32)
    outs, states = cren_rollout_pallas(x_seq, state0, params)
    jax.block_until_ready((outs, states))
    outs_ref, final_state_ref = cren_rollout_ref(x_seq, state0, params)
    assert outs.shape == (T, B, n_outputs) and states.shape == (T, B, n_states)
    assert jnp.allclose(outs, outs_ref, atol=1e-3, rtol=1e-3), \
        float(jnp.max(jnp.abs(outs - outs_ref)))
    assert jnp.allclose(states[-1], final_state_ref, atol=1e-3, rtol=1e-3), \
        float(jnp.max(jnp.abs(states[-1] - final_state_ref)))

    print("KERNEL_OK")
</pallas_src>

<mosaic_0001>
module attributes {stable_mosaic.version = 11 : i64} {
  func.func @kernel(%arg0: i32, %arg1: i32, %arg2: memref<1x1x4xf32, #tpu.memory_space<vmem>>, %arg3: memref<1x128xf32, #tpu.memory_space<vmem>>, %arg4: memref<272x128xf32, #tpu.memory_space<vmem>>, %arg5: memref<1x1x128xf32, #tpu.memory_space<vmem>>, %arg6: memref<1x128xf32, #tpu.memory_space<vmem>>) attributes {dimension_semantics = [#tpu.dimension_semantics<parallel>, #tpu.dimension_semantics<arbitrary>], iteration_bounds = array<i64: 1, 1>, scalar_prefetch = 0 : i64, scratch_operands = 1 : i64, tpu.core_type = #tpu.core_type<tc>, window_params = [{transform_indices = @transform_0, window_bounds = array<i64: 1, 1, 4>}, {transform_indices = @transform_1, window_bounds = array<i64: 1, 128>}, {pipeline_mode = #tpu.pipeline_mode<synchronous>, transform_indices = @transform_2, window_bounds = array<i64: 272, 128>}, {transform_indices = @transform_3, window_bounds = array<i64: 1, 1, 128>}]} {
    %c0_i32 = arith.constant 0 : i32
    %0 = arith.cmpi eq, %arg1, %c0_i32 : i32
    %1 = arith.extui %0 : i1 to i32
    %c0_i32_0 = arith.constant 0 : i32
    %2 = arith.cmpi ne, %1, %c0_i32_0 : i32
    scf.if %2 {
      %c0_35 = arith.constant 0 : index
      %c0_36 = arith.constant 0 : index
      %126 = vector.load %arg3[%c0_35, %c0_36] : memref<1x128xf32, #tpu.memory_space<vmem>>, vector<1x128xf32>
      %c0_37 = arith.constant 0 : index
      %c0_38 = arith.constant 0 : index
      %127 = vector.load %arg6[%c0_37, %c0_38] : memref<1x128xf32, #tpu.memory_space<vmem>>, vector<1x128xf32>
      tpu.vector_store %arg6[%c0_37, %c0_38], %126 {strides = array<i32>} : memref<1x128xf32, #tpu.memory_space<vmem>>, vector<1x128xf32>,
    } else {
    }
    %c0 = arith.constant 0 : index
    %c0_1 = arith.constant 0 : index
    %3 = vector.load %arg4[%c0, %c0_1] : memref<272x128xf32, #tpu.memory_space<vmem>>, vector<8x128xf32>
    %4 = vector.extract_strided_slice %3 {offsets = [0, 0], sizes = [4, 128], strides = [1, 1]} : vector<8x128xf32> to vector<4x128xf32>
    %c8 = arith.constant 8 : index
    %c0_2 = arith.constant 0 : index
    %5 = vector.load %arg4[%c8, %c0_2] : memref<272x128xf32, #tpu.memory_space<vmem>>, vector<128x128xf32>
    %c136 = arith.constant 136 : index
    %c0_3 = arith.constant 0 : index
    %6 = vector.load %arg4[%c136, %c0_3] : memref<272x128xf32, #tpu.memory_space<vmem>>, vector<128x128xf32>
    %c264 = arith.constant 264 : index
    %c0_4 = arith.constant 0 : index
    %7 = vector.load %arg4[%c264, %c0_4] : memref<272x128xf32, #tpu.memory_space<vmem>>, vector<8x128xf32>
    %8 = tpu.iota {dimensions = array<i32: 1>} : vector<1x128xi32>
    %c0_5 = arith.constant 0 : index
    %c0_6 = arith.constant 0 : index
    %9 = vector.load %arg6[%c0_5, %c0_6] : memref<1x128xf32, #tpu.memory_space<vmem>>, vector<1x128xf32>
    %c0_7 = arith.constant 0 : index
    %c0_8 = arith.constant 0 : index
    %c0_9 = arith.constant 0 : index
    %10 = vector.load %arg2[%c0_7, %c0_8, %c0_9] : memref<1x1x4xf32, #tpu.memory_space<vmem>>, vector<1x1x4xf32>
    %11 = vector.shape_cast %10 : vector<1x1x4xf32> to vector<1x4xf32>
    %cst = arith.constant dense<0.000000e+00> : vector<1x128xf32>
    %12 = tpu.matmul %11, %4, %cst {dimension_numbers = #tpu.dot_dimension_numbers<[1], [0], [0], [1], [0, 0, 1, 1], [], []>} : vector<1x4xf32>, vector<4x128xf32>, vector<1x128xf32> -> vector<1x128xf32>
    %cst_10 = arith.constant dense<0.000000e+00> : vector<1x128xf32>
    %13 = tpu.matmul %9, %5, %cst_10 {dimension_numbers = #tpu.dot_dimension_numbers<[1], [0], [0], [1], [0, 0, 1, 1], [], []>} : vector<1x128xf32>, vector<128x128xf32>, vector<1x128xf32> -> vector<1x128xf32>
    %14 = arith.addf %12, %13 : vector<1x128xf32>
    %cst_11 = arith.constant 0.000000e+00 : f32
    %15 = vector.broadcast %cst_11 : f32 to vector<1x128xf32>
    %c0_i32_12 = arith.constant 0 : i32
    %16 = vector.broadcast %c0_i32_12 : i32 to vector<1x128xi32>
    %17 = arith.cmpi eq, %8, %16 : vector<1x128xi32>
    %18 = vector.extract_strided_slice %7 {offsets = [0, 0], sizes = [1, 128], strides = [1, 1]} : vector<8x128xf32> to vector<1x128xf32>
    %19 = arith.mulf %18, %15 : vector<1x128xf32>
    %cst_13 = arith.constant 0.000000e+00 : f32
    %20 = vector.broadcast %cst_13 : f32 to vector<1x128xf32>
    %21 = arith.select %17, %14, %20 : vector<1x128xi1>, vector<1x128xf32>
    %22 = arith.addf %19, %21 : vector<1x128xf32>
    %cst_14 = arith.constant dense<0.000000e+00> : vector<1xf32>
    %23 = vector.multi_reduction <add>, %22, %cst_14 [1] : vector<1x128xf32> to vector<1xf32>
    %24 = vector.shape_cast %23 : vector<1xf32> to vector<1x1xf32>
    %25 = math.tanh %24 : vector<1x1xf32>
    %26 = vector.shape_cast %25 : vector<1x1xf32> to vector<1x1xf32>
    %27 = vector.broadcast %26 : vector<1x1xf32> to vector<1x128xf32>
    %28 = arith.select %17, %27, %15 : vector<1x128xi1>, vector<1x128xf32>
    %c1_i32 = arith.constant 1 : i32
    %29 = vector.broadcast %c1_i32 : i32 to vector<1x128xi32>
    %30 = arith.cmpi eq, %8, %29 : vector<1x128xi32>
    %31 = vector.extract_strided_slice %7 {offsets = [1, 0], sizes = [1, 128], strides = [1, 1]} : vector<8x128xf32> to vector<1x128xf32>
    %32 = arith.mulf %31, %28 : vector<1x128xf32>
    %cst_15 = arith.constant 0.000000e+00 : f32
    %33 = vector.broadcast %cst_15 : f32 to vector<1x128xf32>
    %34 = arith.select %30, %14, %33 : vector<1x128xi1>, vector<1x128xf32>
    %35 = arith.addf %32, %34 : vector<1x128xf32>
    %cst_16 = arith.constant dense<0.000000e+00> : vector<1xf32>
    %36 = vector.multi_reduction <add>, %35, %cst_16 [1] : vector<1x128xf32> to vector<1xf32>
    %37 = vector.shape_cast %36 : vector<1xf32> to vector<1x1xf32>
    %38 = math.tanh %37 : vector<1x1xf32>
    %39 = vector.shape_cast %38 : vector<1x1xf32> to vector<1x1xf32>
    %40 = vector.broadcast %39 : vector<1x1xf32> to vector<1x128xf32>
    %41 = arith.select %30, %40, %28 : vector<1x128xi1>, vector<1x128xf32>
    %c2_i32 = arith.constant 2 : i32
    %42 = vector.broadcast %c2_i32 : i32 to vector<1x128xi32>
    %43 = arith.cmpi eq, %8, %42 : vector<1x128xi32>
    %44 = vector.extract_strided_slice %7 {offsets = [2, 0], sizes = [1, 128], strides = [1, 1]} : vector<8x128xf32> to vector<1x128xf32>
    %45 = arith.mulf %44, %41 : vector<1x128xf32>
    %cst_17 = arith.constant 0.000000e+00 : f32
    %46 = vector.broadcast %cst_17 : f32 to vector<1x128xf32>
    %47 = arith.select %43, %14, %46 : vector<1x128xi1>, vector<1x128xf32>
    %48 = arith.addf %45, %47 : vector<1x128xf32>
    %cst_18 = arith.constant dense<0.000000e+00> : vector<1xf32>
    %49 = vector.multi_reduction <add>, %48, %cst_18 [1] : vector<1x128xf32> to vector<1xf32>
    %50 = vector.shape_cast %49 : vector<1xf32> to vector<1x1xf32>
    %51 = math.tanh %50 : vector<1x1xf32>
    %52 = vector.shape_cast %51 : vector<1x1xf32> to vector<1x1xf32>
    %53 = vector.broadcast %52 : vector<1x1xf32> to vector<1x128xf32>
    %54 = arith.select %43, %53, %41 : vector<1x128xi1>, vector<1x128xf32>
    %c3_i32 = arith.constant 3 : i32
    %55 = vector.broadcast %c3_i32 : i32 to vector<1x128xi32>
    %56 = arith.cmpi eq, %8, %55 : vector<1x128xi32>
    %57 = vector.extract_strided_slice %7 {offsets = [3, 0], sizes = [1, 128], strides = [1, 1]} : vector<8x128xf32> to vector<1x128xf32>
    %58 = arith.mulf %57, %54 : vector<1x128xf32>
    %cst_19 = arith.constant 0.000000e+00 : f32
    %59 = vector.broadcast %cst_19 : f32 to vector<1x128xf32>
    %60 = arith.select %56, %14, %59 : vector<1x128xi1>, vector<1x128xf32>
    %61 = arith.addf %58, %60 : vector<1x128xf32>
    %cst_20 = arith.constant dense<0.000000e+00> : vector<1xf32>
    %62 = vector.multi_reduction <add>, %61, %cst_20 [1] : vector<1x128xf32> to vector<1xf32>
    %63 = vector.shape_cast %62 : vector<1xf32> to vector<1x1xf32>
    %64 = math.tanh %63 : vector<1x1xf32>
    %65 = vector.shape_cast %64 : vector<1x1xf32> to vector<1x1xf32>
    %66 = vector.broadcast %65 : vector<1x1xf32> to vector<1x128xf32>
    %67 = arith.select %56, %66, %54 : vector<1x128xi1>, vector<1x128xf32>
    %c4_i32 = arith.constant 4 : i32
    %68 = vector.broadcast %c4_i32 : i32 to vector<1x128xi32>
    %69 = arith.cmpi eq, %8, %68 : vector<1x128xi32>
    %70 = vector.extract_strided_slice %7 {offsets = [4, 0], sizes = [1, 128], strides = [1, 1]} : vector<8x128xf32> to vector<1x128xf32>
    %71 = arith.mulf %70, %67 : vector<1x128xf32>
    %cst_21 = arith.constant 0.000000e+00 : f32
    %72 = vector.broadcast %cst_21 : f32 to vector<1x128xf32>
    %73 = arith.select %69, %14, %72 : vector<1x128xi1>, vector<1x128xf32>
    %74 = arith.addf %71, %73 : vector<1x128xf32>
    %cst_22 = arith.constant dense<0.000000e+00> : vector<1xf32>
    %75 = vector.multi_reduction <add>, %74, %cst_22 [1] : vector<1x128xf32> to vector<1xf32>
    %76 = vector.shape_cast %75 : vector<1xf32> to vector<1x1xf32>
    %77 = math.tanh %76 : vector<1x1xf32>
    %78 = vector.shape_cast %77 : vector<1x1xf32> to vector<1x1xf32>
    %79 = vector.broadcast %78 : vector<1x1xf32> to vector<1x128xf32>
    %80 = arith.select %69, %79, %67 : vector<1x128xi1>, vector<1x128xf32>
    %c5_i32 = arith.constant 5 : i32
    %81 = vector.broadcast %c5_i32 : i32 to vector<1x128xi32>
    %82 = arith.cmpi eq, %8, %81 : vector<1x128xi32>
    %83 = vector.extract_strided_slice %7 {offsets = [5, 0], sizes = [1, 128], strides = [1, 1]} : vector<8x128xf32> to vector<1x128xf32>
    %84 = arith.mulf %83, %80 : vector<1x128xf32>
    %cst_23 = arith.constant 0.000000e+00 : f32
    %85 = vector.broadcast %cst_23 : f32 to vector<1x128xf32>
    %86 = arith.select %82, %14, %85 : vector<1x128xi1>, vector<1x128xf32>
    %87 = arith.addf %84, %86 : vector<1x128xf32>
    %cst_24 = arith.constant dense<0.000000e+00> : vector<1xf32>
    %88 = vector.multi_reduction <add>, %87, %cst_24 [1] : vector<1x128xf32> to vector<1xf32>
    %89 = vector.shape_cast %88 : vector<1xf32> to vector<1x1xf32>
    %90 = math.tanh %89 : vector<1x1xf32>
    %91 = vector.shape_cast %90 : vector<1x1xf32> to vector<1x1xf32>
    %92 = vector.broadcast %91 : vector<1x1xf32> to vector<1x128xf32>
    %93 = arith.select %82, %92, %80 : vector<1x128xi1>, vector<1x128xf32>
    %c6_i32 = arith.constant 6 : i32
    %94 = vector.broadcast %c6_i32 : i32 to vector<1x128xi32>
    %95 = arith.cmpi eq, %8, %94 : vector<1x128xi32>
    %96 = vector.extract_strided_slice %7 {offsets = [6, 0], sizes = [1, 128], strides = [1, 1]} : vector<8x128xf32> to vector<1x128xf32>
    %97 = arith.mulf %96, %93 : vector<1x128xf32>
    %cst_25 = arith.constant 0.000000e+00 : f32
    %98 = vector.broadcast %cst_25 : f32 to vector<1x128xf32>
    %99 = arith.select %95, %14, %98 : vector<1x128xi1>, vector<1x128xf32>
    %100 = arith.addf %97, %99 : vector<1x128xf32>
    %cst_26 = arith.constant dense<0.000000e+00> : vector<1xf32>
    %101 = vector.multi_reduction <add>, %100, %cst_26 [1] : vector<1x128xf32> to vector<1xf32>
    %102 = vector.shape_cast %101 : vector<1xf32> to vector<1x1xf32>
    %103 = math.tanh %102 : vector<1x1xf32>
    %104 = vector.shape_cast %103 : vector<1x1xf32> to vector<1x1xf32>
    %105 = vector.broadcast %104 : vector<1x1xf32> to vector<1x128xf32>
    %106 = arith.select %95, %105, %93 : vector<1x128xi1>, vector<1x128xf32>
    %c7_i32 = arith.constant 7 : i32
    %107 = vector.broadcast %c7_i32 : i32 to vector<1x128xi32>
    %108 = arith.cmpi eq, %8, %107 : vector<1x128xi32>
    %109 = vector.extract_strided_slice %7 {offsets = [7, 0], sizes = [1, 128], strides = [1, 1]} : vector<8x128xf32> to vector<1x128xf32>
    %110 = arith.mulf %109, %106 : vector<1x128xf32>
    %cst_27 = arith.constant 0.000000e+00 : f32
    %111 = vector.broadcast %cst_27 : f32 to vector<1x128xf32>
    %112 = arith.select %108, %14, %111 : vector<1x128xi1>, vector<1x128xf32>
    %113 = arith.addf %110, %112 : vector<1x128xf32>
    %cst_28 = arith.constant dense<0.000000e+00> : vector<1xf32>
    %114 = vector.multi_reduction <add>, %113, %cst_28 [1] : vector<1x128xf32> to vector<1xf32>
    %115 = vector.shape_cast %114 : vector<1xf32> to vector<1x1xf32>
    %116 = math.tanh %115 : vector<1x1xf32>
    %117 = vector.shape_cast %116 : vector<1x1xf32> to vector<1x1xf32>
    %118 = vector.broadcast %117 : vector<1x1xf32> to vector<1x128xf32>
    %119 = arith.select %108, %118, %106 : vector<1x128xi1>, vector<1x128xf32>
    %cst_29 = arith.constant dense<0.000000e+00> : vector<1x128xf32>
    %120 = tpu.matmul %119, %6, %cst_29 {dimension_numbers = #tpu.dot_dimension_numbers<[1], [0], [0], [1], [0, 0, 1, 1], [], []>} : vector<1x128xf32>, vector<128x128xf32>, vector<1x128xf32> -> vector<1x128xf32>
    %121 = arith.addf %14, %120 : vector<1x128xf32>
    %c0_30 = arith.constant 0 : index
    %c0_31 = arith.constant 0 : index
    %c0_32 = arith.constant 0 : index
    %122 = vector.load %arg5[%c0_30, %c0_31, %c0_32] : memref<1x1x128xf32, #tpu.memory_space<vmem>>, vector<1x1x128xf32>
    %123 = vector.shape_cast %122 : vector<1x1x128xf32> to vector<1x128xf32>
    %124 = vector.shape_cast %121 : vector<1x128xf32> to vector<1x1x128xf32>
    tpu.vector_store %arg5[%c0_30, %c0_31, %c0_32], %124 {strides = array<i32>} : memref<1x1x128xf32, #tpu.memory_space<vmem>>, vector<1x1x128xf32>,
    %c0_33 = arith.constant 0 : index
    %c0_34 = arith.constant 0 : index
    %125 = vector.load %arg6[%c0_33, %c0_34] : memref<1x128xf32, #tpu.memory_space<vmem>>, vector<1x128xf32>
    tpu.vector_store %arg6[%c0_33, %c0_34], %121 {strides = array<i32>} : memref<1x128xf32, #tpu.memory_space<vmem>>, vector<1x128xf32>,
    return
  }
  func.func @transform_0(%arg0: i32, %arg1: i32) -> (i32, i32, i32) {
    %c0_i32 = arith.constant 0 : i32
    %c0_i32_0 = arith.constant 0 : i32
    return %arg1, %arg0, %c0_i32 : i32, i32, i32
  }
  func.func @transform_1(%arg0: i32, %arg1: i32) -> (i32, i32) {
    %c0_i32 = arith.constant 0 : i32
    %c0_i32_0 = arith.constant 0 : i32
    return %arg0, %c0_i32 : i32, i32
  }
  func.func @transform_2(%arg0: i32, %arg1: i32) -> (i32, i32) {
    %c0_i32 = arith.constant 0 : i32
    %c0_i32_0 = arith.constant 0 : i32
    %c0_i32_1 = arith.constant 0 : i32
    return %c0_i32, %c0_i32_0 : i32, i32
  }
  func.func @transform_3(%arg0: i32, %arg1: i32) -> (i32, i32, i32) {
    %c0_i32 = arith.constant 0 : i32
    %c0_i32_0 = arith.constant 0 : i32
    return %arg1, %arg0, %c0_i32 : i32, i32, i32
  }
}

</mosaic_0001>

<llo_original>
// kernel: _cren_rollout_impl.1
$region0: #{_cren_rollout_impl.1}
  #allocation0 [shape = 'u32[]', space=smem, size = 0x4, offset = 0x4, fixed_abs, tag = 'smem constant byte address 0x4 - core index']
  #allocation1 [shape = 'u32[144,128]{1,0:T(1,128)}', space=vmem, size = 0x12000, scoped, tag = 'internal scratch']
  #allocation2 [shape = 'f32[1,128]{1,0:T(1,128)}', space=vmem, size = 0x200, scoped, tag = 'scratch operand']
  %s0 = inlined_call_operand.vmem [shape: f32[1,1,4], index: 0, kind: input, shape index: {}]
  %s1 = inlined_call_operand.vmem [shape: f32[1,128], index: 1, kind: input, shape index: {}]
  %s2 = inlined_call_operand.hbm [shape: f32[272,128], index: 2, kind: input, shape index: {}]
  %s3 = inlined_call_operand.vmem [shape: f32[1,1,128], index: 3, kind: output, shape index: {}]
  %s4 = sld [smem:[#allocation0]]
  $region30: #{_cren_rollout_impl.1} parent=0
    _
  %s6 = ssub.s32 1, %s4
  %s7 = scalar_select 0, %s6, %s4
  $region1: #{_cren_rollout_impl.1} parent=0
    #allocation3 [shape = 'u8[139264]{0}', space=vmem, size = 0x22000, scoped, tag = 'input window, operand 2, single buffered']
    #allocation4 [shape = 's32[1]{0}', space=sflag, size = 0x4, scoped, tag = 'scoped memory for _cren_rollout_impl.1']
    %8 = vsyncpa [#allocation4], 0
    // Predicated region
    $region2: #{_cren_rollout_impl.1} parent=1 // pred_check
      _
    $region3: #{_cren_rollout_impl.1} parent=1 // pred_check_branch
      %10 = sbr.rel (0) target = $region5
    $region4: #{_cren_rollout_impl.1} parent=1 // pred_region
      _
    $region5: #{_cren_rollout_impl.1} parent=1 // pred_fallthru
      _
    // Predicated region
    $region6: #{_cren_rollout_impl.1} parent=1 // pred_check
      _
    $region7: #{_cren_rollout_impl.1} parent=1 // pred_check_branch
      %12 = sbr.rel (0) target = $region9
    $region8: #{_cren_rollout_impl.1} parent=1 // pred_region
      _
    $region9: #{_cren_rollout_impl.1} parent=1 // pred_fallthru
      _
    // Predicated region
    $region10: #{_cren_rollout_impl.1} parent=1 // pred_check
      _
    $region11: #{_cren_rollout_impl.1} parent=1 // pred_check_branch
      %14 = sbr.rel (0) target = $region13
    $region12: #{_cren_rollout_impl.1} parent=1 // pred_region
      %s16 = ssub.s32 4352, 4352
      %17 = vsyncadd [#allocation4], %s16
      %s18 = sshll.u32 [#allocation3], 4
      %s19 = int_to_ptr.vmem [resolvable:$true] %s18
      %24 = dma.hbm_to_vmem [thread:$0]  %s2, 4352, %s19, [#allocation4], 128, 128, 8
    $region13: #{_cren_rollout_impl.1} parent=1 // pred_fallthru
      _
    // Predicated region
    $region14: #{_cren_rollout_impl.1} parent=1 // pred_check
      _
    $region15: #{_cren_rollout_impl.1} parent=1 // pred_check_branch
      %26 = sbr.rel (0) target = $region17
    $region16: #{_cren_rollout_impl.1} parent=1 // pred_region
      %27 = dma.done [#allocation4], 4352
    $region17: #{_cren_rollout_impl.1} parent=1 // pred_fallthru
      _
    %p28 = scmp.eq.s32.totalorder 0, 0
    // Predicated region
    $region18: #{_cren_rollout_impl.1} parent=1 // pred_check
      %p29 = pneg %p28
    $region19: #{_cren_rollout_impl.1} parent=1 // pred_check_branch
      %31 = sbr.rel (%p29) target = $region21
    $region20: #{_cren_rollout_impl.1} parent=1 // pred_region
      %v32 = vld [vmem:[%s1] sm:$0x1]
      %33 = vst [vmem:[#allocation2] sm:$0x1] %v32
    $region21: #{_cren_rollout_impl.1} parent=1 // pred_fallthru
      _
    %v34 = vld [vmem:[#allocation3] sm:$0xff]
    %v35 = vld [vmem:[#allocation3 + $0x8] sm:$0xff]
    %v36 = vld [vmem:[#allocation3 + $0x10] sm:$0xff]
    %v37 = vld [vmem:[#allocation3 + $0x18] sm:$0xff]
    %v38 = vld [vmem:[#allocation3 + $0x20] sm:$0xff]
    %v39 = vld [vmem:[#allocation3 + $0x28] sm:$0xff]
    %v40 = vld [vmem:[#allocation3 + $0x30] sm:$0xff]
    %v41 = vld [vmem:[#allocation3 + $0x38] sm:$0xff]
    %v42 = vld [vmem:[#allocation3 + $0x40] sm:$0xff]
    %v43 = vld [vmem:[#allocation3 + $0x48] sm:$0xff]
    %v44 = vld [vmem:[#allocation3 + $0x50] sm:$0xff]
    %v45 = vld [vmem:[#allocation3 + $0x58] sm:$0xff]
    %v46 = vld [vmem:[#allocation3 + $0x60] sm:$0xff]
    %v47 = vld [vmem:[#allocation3 + $0x68] sm:$0xff]
    %v48 = vld [vmem:[#allocation3 + $0x70] sm:$0xff]
    %v49 = vld [vmem:[#allocation3 + $0x78] sm:$0xff]
    %v50 = vld [vmem:[#allocation3 + $0x80] sm:$0xff]
    %v51 = vld [vmem:[#allocation3 + $0x88] sm:$0xff]
    %v52 = vld [vmem:[#allocation3 + $0x90] sm:$0xff]
    %v53 = vld [vmem:[#allocation3 + $0x98] sm:$0xff]
    %v54 = vld [vmem:[#allocation3 + $0xa0] sm:$0xff]
    %v55 = vld [vmem:[#allocation3 + $0xa8] sm:$0xff]
    %v56 = vld [vmem:[#allocation3 + $0xb0] sm:$0xff]
    %v57 = vld [vmem:[#allocation3 + $0xb8] sm:$0xff]
    %v58 = vld [vmem:[#allocation3 + $0xc0] sm:$0xff]
    %v59 = vld [vmem:[#allocation3 + $0xc8] sm:$0xff]
    %v60 = vld [vmem:[#allocation3 + $0xd0] sm:$0xff]
    %v61 = vld [vmem:[#allocation3 + $0xd8] sm:$0xff]
    %v62 = vld [vmem:[#allocation3 + $0xe0] sm:$0xff]
    %v63 = vld [vmem:[#allocation3 + $0xe8] sm:$0xff]
    %v64 = vld [vmem:[#allocation3 + $0xf0] sm:$0xff]
    %v65 = vld [vmem:[#allocation3 + $0xf8] sm:$0xff]
    %v66 = vld [vmem:[#allocation3 + $0x100] sm:$0xff]
    %v67 = vld [vmem:[#allocation3 + $0x108] sm:$0xff]
    %v68 = vlaneseq
    %v69 = vand.u32 %v68, 127
    %v70 = vld [vmem:[#allocation2] sm:$0x1]
    %v71 = vld [vmem:[%s0] sm:$0x1]
    %72 = vmatprep.subr.mxu0 0.0
    %73 = vmatpush1.msra.mxu0 %v35
    %74 = vmatprep.subr.mxu0 0.0
    %75 = vmatpush1.msra.mxu0 %v36
    %76 = vmatprep.subr.mxu0 0.0
    %77 = vmatpush1.msra.mxu0 %v37
    %78 = vmatprep.subr.mxu0 0.0
    %79 = vmatpush1.msra.mxu0 %v38
    %80 = vmatprep.subr.mxu0 0.0
    %81 = vmatpush1.msra.mxu0 %v39
    %82 = vmatprep.subr.mxu0 0.0
    %83 = vmatpush1.msra.mxu0 %v40
    %84 = vmatprep.subr.mxu0 0.0
    %85 = vmatpush1.msra.mxu0 %v41
    %86 = vmatprep.subr.mxu0 0.0
    %87 = vmatpush1.msra.mxu0 %v42
    %88 = vmatprep.subr.mxu0 0.0
    %89 = vmatpush1.msra.mxu0 %v43
    %90 = vmatprep.subr.mxu0 0.0
    %91 = vmatpush1.msra.mxu0 %v44
    %92 = vmatprep.subr.mxu0 0.0
    %93 = vmatpush1.msra.mxu0 %v45
    %94 = vmatprep.subr.mxu0 0.0
    %95 = vmatpush1.msra.mxu0 %v46
    %96 = vmatprep.subr.mxu0 0.0
    %97 = vmatpush1.msra.mxu0 %v47
    %98 = vmatprep.subr.mxu0 0.0
    %99 = vmatpush1.msra.mxu0 %v48
    %100 = vmatprep.subr.mxu0 0.0
    %101 = vmatpush1.msra.mxu0 %v49
    %102 = vmatprep.subr.mxu0 0.0
    %103 = vmatpush1.msra.mxu0 %v50
    %104 = vmatprep.subr.mxu0 0.0
    %105 = vmatpush1.msra.mxu0 0.0
    %106 = vmatprep.subr.mxu0 0.0
    %107 = vmatpush1.msra.mxu0 0.0
    %108 = vmatprep.subr.mxu0 0.0
    %109 = vmatpush1.msra.mxu0 0.0
    %110 = vmatprep.subr.mxu0 0.0
    %111 = vmatpush1.msra.mxu0 0.0
    %112 = vmatprep.subr.mxu0 0.0
    %113 = vmatpush1.msra.mxu0 0.0
    %114 = vmatprep.subr.mxu0 0.0
    %115 = vmatpush1.msra.mxu0 0.0
    %116 = vmatprep.subr.mxu0 0.0
    %117 = vmatpush1.msra.mxu0 0.0
    %118 = vmatprep.subr.mxu0 0.0
    %119 = vmatpush1.msra.mxu0 0.0
    %120 = vmatprep.subr.mxu0 0.0
    %121 = vmatpush1.msra.mxu0 0.0
    %122 = vmatprep.subr.mxu0 0.0
    %123 = vmatpush1.msra.mxu0 0.0
    %124 = vmatprep.subr.mxu0 0.0
    %125 = vmatpush1.msra.mxu0 0.0
    %126 = vmatprep.subr.mxu0 0.0
    %127 = vmatpush1.msra.mxu0 0.0
    %128 = vmatprep.subr.mxu0 0.0
    %129 = vmatpush1.msra.mxu0 0.0
    %130 = vmatprep.subr.mxu0 0.0
    %131 = vmatpush1.msra.mxu0 0.0
    %132 = vmatprep.subr.mxu0 0.0
    %133 = vmatpush1.msra.mxu0 0.0
    %134 = vmatprep.subr.mxu0 0.0
    %135 = vmatpush1.msra.mxu0 0.0
    %136 = vmatprep.mubr.f32.mxu0 0.0
    %137 = vmatmul.mubr.f32.gmra.mrb[0].mxu0 %v70
    %v138 = vpop.f32.mrb[0].mxu0
    %v139 = vadd.f32 0.0, %v138
    %v140 = vpop.f32.mrb[0].mxu0
    %141 = vdwg.mxu0
    %vm142 = vcmask 31744
    %v144 = vsel %vm142, %v71, 0
    %vm146 = vcmask 1043456
    %v148 = vsel %vm146, %v34, 0
    %150 = vmatprep.subr.mxu0 0.0
    %151 = vmatpush1.msra.mxu0 %v148
    %152 = vmatprep.subr.mxu0 0.0
    %153 = vmatpush1.msra.mxu0 0.0
    %154 = vmatprep.subr.mxu0 0.0
    %155 = vmatpush1.msra.mxu0 0.0
    %156 = vmatprep.subr.mxu0 0.0
    %157 = vmatpush1.msra.mxu0 0.0
    %158 = vmatprep.subr.mxu0 0.0
    %159 = vmatpush1.msra.mxu0 0.0
    %160 = vmatprep.subr.mxu0 0.0
    %161 = vmatpush1.msra.mxu0 0.0
    %162 = vmatprep.subr.mxu0 0.0
    %163 = vmatpush1.msra.mxu0 0.0
    %164 = vmatprep.subr.mxu0 0.0
    %165 = vmatpush1.msra.mxu0 0.0
    %166 = vmatprep.subr.mxu0 0.0
    %167 = vmatpush1.msra.mxu0 0.0
    %168 = vmatprep.subr.mxu0 0.0
    %169 = vmatpush1.msra.mxu0 0.0
    %170 = vmatprep.subr.mxu0 0.0
    %171 = vmatpush1.msra.mxu0 0.0
    %172 = vmatprep.subr.mxu0 0.0
    %173 = vmatpush1.msra.mxu0 0.0
    %174 = vmatprep.subr.mxu0 0.0
    %175 = vmatpush1.msra.mxu0 0.0
    %176 = vmatprep.subr.mxu0 0.0
    %177 = vmatpush1.msra.mxu0 0.0
    %178 = vmatprep.subr.mxu0 0.0
    %179 = vmatpush1.msra.mxu0 0.0
    %180 = vmatprep.subr.mxu0 0.0
    %181 = vmatpush1.msra.mxu0 0.0
    %182 = vmatprep.subr.mxu0 0.0
    %183 = vmatpush1.msra.mxu0 0.0
    %184 = vmatprep.subr.mxu0 0.0
    %185 = vmatpush1.msra.mxu0 0.0
    %186 = vmatprep.subr.mxu0 0.0
    %187 = vmatpush1.msra.mxu0 0.0
    %188 = vmatprep.subr.mxu0 0.0
    %189 = vmatpush1.msra.mxu0 0.0
    %190 = vmatprep.subr.mxu0 0.0
    %191 = vmatpush1.msra.mxu0 0.0
    %192 = vmatprep.subr.mxu0 0.0
    %193 = vmatpush1.msra.mxu0 0.0
    %194 = vmatprep.subr.mxu0 0.0
    %195 = vmatpush1.msra.mxu0 0.0
    %196 = vmatprep.subr.mxu0 0.0
    %197 = vmatpush1.msra.mxu0 0.0
    %198 = vmatprep.subr.mxu0 0.0
    %199 = vmatpush1.msra.mxu0 0.0
    %200 = vmatprep.subr.mxu0 0.0
    %201 = vmatpush1.msra.mxu0 0.0
    %202 = vmatprep.subr.mxu0 0.0
    %203 = vmatpush1.msra.mxu0 0.0
    %204 = vmatprep.subr.mxu0 0.0
    %205 = vmatpush1.msra.mxu0 0.0
    %206 = vmatprep.subr.mxu0 0.0
    %207 = vmatpush1.msra.mxu0 0.0
    %208 = vmatprep.subr.mxu0 0.0
    %209 = vmatpush1.msra.mxu0 0.0
    %210 = vmatprep.subr.mxu0 0.0
    %211 = vmatpush1.msra.mxu0 0.0
    %212 = vmatprep.subr.mxu0 0.0
    %213 = vmatpush1.msra.mxu0 0.0
    %214 = vmatprep.mubr.f32.mxu0 0.0
    %215 = vmatmul.mubr.f32.gmra.mrb[0].mxu0 %v144
    %v216 = vpop.f32.mrb[0].mxu0
    %v217 = vadd.f32 %v139, %v216
    %v218 = vpop.f32.mrb[0].mxu0
    %219 = vdwg.mxu0
    %vm220 = vcmp.eq.s32.totalorder %v69, 0
    %v221 = vmul.f32 %v67, 0.0
    %v222 = vsel %vm220, %v217, 0.0
    %v223 = vadd.f32 %v221, %v222
    %vm224 = vcmask 1040384
    %v225 = vsel %vm224, %v223, 0.0
    %226 = vadd.xlane.f32.xlu0 %v225
    %v227 = vpop.xlane.xlu0 %226
    %v228 = vtanh.pop %v227
    %v229 = vsel %vm220, %v228, 0.0
    %vm230 = vcmp.eq.s32.totalorder %v69, 1
    %v232 = vrot.slane %v229, 7
    %v234 = vmul.f32 %v67, %v232
    %v235 = vsel %vm230, %v217, 0.0
    %v237 = vrot.slane %v235, 7
    %v239 = vadd.f32 %v234, %v237
    %vm240 = vcmask 1041409
    %v241 = vsel %vm240, %v239, 0.0
    %242 = vadd.xlane.f32.xlu0 %v241
    %v243 = vpop.xlane.xlu0 %242
    %v244 = vtanh.pop %v243
    %v245 = vsel %vm230, %v244, %v232
    %vm246 = vcmp.eq.s32.totalorder %v69, 2
    %v248 = vrot.slane %v245, 7
    %v250 = vmul.f32 %v67, %v248
    %v251 = vsel %vm246, %v217, 0.0
    %v253 = vrot.slane %v251, 6
    %v255 = vadd.f32 %v250, %v253
    %vm256 = vcmask 1042434
    %v257 = vsel %vm256, %v255, 0.0
    %258 = vadd.xlane.f32.xlu0 %v257
    %v259 = vpop.xlane.xlu0 %258
    %v260 = vtanh.pop %v259
    %v261 = vsel %vm246, %v260, %v248
    %vm262 = vcmp.eq.s32.totalorder %v69, 3
    %v264 = vrot.slane %v261, 7
    %v266 = vmul.f32 %v67, %v264
    %v267 = vsel %vm262, %v217, 0.0
    %v269 = vrot.slane %v267, 5
    %v271 = vadd.f32 %v266, %v269
    %vm272 = vcmask 1043459
    %v273 = vsel %vm272, %v271, 0.0
    %274 = vadd.xlane.f32.xlu0 %v273
    %v275 = vpop.xlane.xlu0 %274
    %v276 = vtanh.pop %v275
    %v277 = vsel %vm262, %v276, %v264
    %vm278 = vcmp.eq.s32.totalorder %v69, 4
    %v280 = vrot.slane %v277, 7
    %v282 = vmul.f32 %v67, %v280
    %v283 = vsel %vm278, %v217, 0.0
    %v285 = vrot.slane %v283, 4
    %v287 = vadd.f32 %v282, %v285
    %vm288 = vcmask 1044484
    %v289 = vsel %vm288, %v287, 0.0
    %290 = vadd.xlane.f32.xlu0 %v289
    %v291 = vpop.xlane.xlu0 %290
    %v292 = vtanh.pop %v291
    %v293 = vsel %vm278, %v292, %v280
    %vm294 = vcmp.eq.s32.totalorder %v69, 5
    %v296 = vrot.slane %v293, 7
    %v298 = vmul.f32 %v67, %v296
    %v299 = vsel %vm294, %v217, 0.0
    %v301 = vrot.slane %v299, 3
    %v303 = vadd.f32 %v298, %v301
    %vm304 = vcmask 1045509
    %v305 = vsel %vm304, %v303, 0.0
    %306 = vadd.xlane.f32.xlu0 %v305
    %v307 = vpop.xlane.xlu0 %306
    %v308 = vtanh.pop %v307
    %v309 = vsel %vm294, %v308, %v296
    %vm310 = vcmp.eq.s32.totalorder %v69, 6
    %v312 = vrot.slane %v309, 7
    %v314 = vmul.f32 %v67, %v312
    %v315 = vsel %vm310, %v217, 0.0
    %v317 = vrot.slane %v315, 2
    %v319 = vadd.f32 %v314, %v317
    %vm320 = vcmask 1046534
    %v321 = vsel %vm320, %v319, 0.0
    %322 = vadd.xlane.f32.xlu0 %v321
    %v323 = vpop.xlane.xlu0 %322
    %v324 = vtanh.pop %v323
    %v325 = vsel %vm310, %v324, %v312
    %vm326 = vcmp.eq.s32.totalorder %v69, 7
    %v328 = vrot.slane %v325, 7
    %v330 = vmul.f32 %v67, %v328
    %v331 = vsel %vm326, %v217, 0.0
    %v333 = vrot.slane %v331, 1
    %v335 = vadd.f32 %v330, %v333
    %vm336 = vcmask 1047559
    %v337 = vsel %vm336, %v335, 0.0
    %338 = vadd.xlane.f32.xlu0 %v337
    %v339 = vpop.xlane.xlu0 %338
    %v340 = vtanh.pop %v339
    %v341 = vsel %vm326, %v340, %v328
    %v343 = vrot.slane %v341, 7
    %345 = vmatprep.subr.mxu0 0.0
    %346 = vmatpush1.msra.mxu0 %v51
    %347 = vmatprep.subr.mxu0 0.0
    %348 = vmatpush1.msra.mxu0 %v52
    %349 = vmatprep.subr.mxu0 0.0
    %350 = vmatpush1.msra.mxu0 %v53
    %351 = vmatprep.subr.mxu0 0.0
    %352 = vmatpush1.msra.mxu0 %v54
    %353 = vmatprep.subr.mxu0 0.0
    %354 = vmatpush1.msra.mxu0 %v55
    %355 = vmatprep.subr.mxu0 0.0
    %356 = vmatpush1.msra.mxu0 %v56
    %357 = vmatprep.subr.mxu0 0.0
    %358 = vmatpush1.msra.mxu0 %v57
    %359 = vmatprep.subr.mxu0 0.0
    %360 = vmatpush1.msra.mxu0 %v58
    %361 = vmatprep.subr.mxu0 0.0
    %362 = vmatpush1.msra.mxu0 %v59
    %363 = vmatprep.subr.mxu0 0.0
    %364 = vmatpush1.msra.mxu0 %v60
    %365 = vmatprep.subr.mxu0 0.0
    %366 = vmatpush1.msra.mxu0 %v61
    %367 = vmatprep.subr.mxu0 0.0
    %368 = vmatpush1.msra.mxu0 %v62
    %369 = vmatprep.subr.mxu0 0.0
    %370 = vmatpush1.msra.mxu0 %v63
    %371 = vmatprep.subr.mxu0 0.0
    %372 = vmatpush1.msra.mxu0 %v64
    %373 = vmatprep.subr.mxu0 0.0
    %374 = vmatpush1.msra.mxu0 %v65
    %375 = vmatprep.subr.mxu0 0.0
    %376 = vmatpush1.msra.mxu0 %v66
    %377 = vmatprep.subr.mxu0 0.0
    %378 = vmatpush1.msra.mxu0 0.0
    %379 = vmatprep.subr.mxu0 0.0
    %380 = vmatpush1.msra.mxu0 0.0
    %381 = vmatprep.subr.mxu0 0.0
    %382 = vmatpush1.msra.mxu0 0.0
    %383 = vmatprep.subr.mxu0 0.0
    %384 = vmatpush1.msra.mxu0 0.0
    %385 = vmatprep.subr.mxu0 0.0
    %386 = vmatpush1.msra.mxu0 0.0
    %387 = vmatprep.subr.mxu0 0.0
    %388 = vmatpush1.msra.mxu0 0.0
    %389 = vmatprep.subr.mxu0 0.0
    %390 = vmatpush1.msra.mxu0 0.0
    %391 = vmatprep.subr.mxu0 0.0
    %392 = vmatpush1.msra.mxu0 0.0
    %393 = vmatprep.subr.mxu0 0.0
    %394 = vmatpush1.msra.mxu0 0.0
    %395 = vmatprep.subr.mxu0 0.0
    %396 = vmatpush1.msra.mxu0 0.0
    %397 = vmatprep.subr.mxu0 0.0
    %398 = vmatpush1.msra.mxu0 0.0
    %399 = vmatprep.subr.mxu0 0.0
    %400 = vmatpush1.msra.mxu0 0.0
    %401 = vmatprep.subr.mxu0 0.0
    %402 = vmatpush1.msra.mxu0 0.0
    %403 = vmatprep.subr.mxu0 0.0
    %404 = vmatpush1.msra.mxu0 0.0
    %405 = vmatprep.subr.mxu0 0.0
    %406 = vmatpush1.msra.mxu0 0.0
    %407 = vmatprep.subr.mxu0 0.0
    %408 = vmatpush1.msra.mxu0 0.0
    %409 = vmatprep.mubr.f32.mxu0 0.0
    %410 = vmatmul.mubr.f32.gmra.mrb[0].mxu0 %v343
    %v411 = vpop.f32.mrb[0].mxu0
    %v412 = vadd.f32 0.0, %v411
    %v413 = vpop.f32.mrb[0].mxu0
    %414 = vdwg.mxu0
    %v415 = vadd.f32 %v217, %v412
    %416 = vst [vmem:[%s3] sm:$0x1] %v415
    %417 = vst [vmem:[#allocation2] sm:$0x1] %v415
    // Predicated region
    $region22: #{_cren_rollout_impl.1} parent=1 // pred_check
      _
    $region23: #{_cren_rollout_impl.1} parent=1 // pred_check_branch
      %419 = sbr.rel (0) target = $region25
    $region24: #{_cren_rollout_impl.1} parent=1 // pred_region
      _
    $region25: #{_cren_rollout_impl.1} parent=1 // pred_fallthru
      _
    // Predicated region
    $region26: #{_cren_rollout_impl.1} parent=1 // pred_check
      _
    $region27: #{_cren_rollout_impl.1} parent=1 // pred_check_branch
      %421 = sbr.rel (0) target = $region29
    $region28: #{_cren_rollout_impl.1} parent=1 // pred_region
      _
    $region29: #{_cren_rollout_impl.1} parent=1 // pred_fallthru
      _
    %422 = vsyncpa [#allocation4], 1

</llo_original>
